<compile_context>
chip_gen: v5e
topology: v5e:2x2
jax: 0.10.0
libtpu: 0.0.40
codegen_flags: <defaults>
</compile_context>

<pallas_src>
import jax
import jax.numpy as jnp
from jax import lax
from jax.experimental import pallas as pl
from jax.experimental.pallas import tpu as pltpu

_LANE = 128
_SUBLANE = 8


def _round_up(x, m):
    return ((x + m - 1) // m) * m


def _pad2d(a, rows, cols):
    r, c = a.shape
    return jnp.pad(a, ((0, rows - r), (0, cols - c)))


def _make_kernel(t_actual):
    """t_actual is the (static) real number of key/value rows before padding."""

    def kernel(q_ref, k_ref, v_ref, wq_ref, wk_ref, wv_ref, out_ref):
        # Projections on the MXU with f32 accumulation.
        q_proj = jnp.dot(q_ref[...], wq_ref[...],
                         preferred_element_type=jnp.float32)            # (1, Hp)
        k_proj = jnp.dot(k_ref[...], wk_ref[...],
                         preferred_element_type=jnp.float32)            # (Tp, Hp)

        feats = jnp.tanh(k_proj + q_proj)                               # (Tp, Hp)

        # scores = feats @ w_v^T  done as VPU mul + XLU lane-reduce
        # (avoids a lane-width-1 matmul result).
        scores = jnp.sum(feats * wv_ref[...], axis=1, keepdims=True)    # (Tp, 1)

        # Mask padded key rows, then softmax over dim 0 (the T axis).
        rows = lax.broadcasted_iota(jnp.int32, scores.shape, 0)
        scores = jnp.where(rows < t_actual, scores, jnp.float32(-1e30))
        m = jnp.max(scores, axis=0, keepdims=True)
        e = jnp.exp(scores - m)
        attn = e / jnp.sum(e, axis=0, keepdims=True)                    # (Tp, 1)

        # bmm(attn, values) followed by sum over dim 0
        #   == sum_t attn[t] * values[t]
        ctx = jnp.sum(attn * v_ref[...], axis=0, keepdims=True)         # (1, Vp)
        out_ref[...] = ctx.astype(out_ref.dtype)

    return kernel


def prepare_params(params):
    """One-time weight prep: transpose + zero-pad to lane-dense shapes."""
    w_q, w_k, w_v = params["w_q"], params["w_k"], params["w_v"]
    H, Q = w_q.shape
    _, K = w_k.shape
    Hp, Qp, Kp = _round_up(H, _LANE), _round_up(Q, _LANE), _round_up(K, _LANE)
    return {
        "wq_t": _pad2d(w_q.T, Qp, Hp),                 # (Qp, Hp)
        "wk_t": _pad2d(w_k.T, Kp, Hp),                 # (Kp, Hp)
        "wv_row": _pad2d(w_v.reshape(1, H), 1, Hp),    # (1, Hp)
        "dims": (Q, K, H, Qp, Kp, Hp),
    }


def additive_attention_forward(queries, keys, values, prepared):
    """queries (1,1,Q), keys (T,1,K), values (T,1,V) -> context (1,V)."""
    Q, K, H, Qp, Kp, Hp = prepared["dims"]
    T = keys.shape[0]
    V = values.shape[-1]
    Tp = _round_up(T, _SUBLANE)
    Vp = _round_up(V, _LANE)

    q2 = _pad2d(queries.reshape(1, Q), 1, Qp)          # (1, Qp)
    k2 = _pad2d(keys.reshape(T, K), Tp, Kp)            # (Tp, Kp)
    v2 = _pad2d(values.reshape(T, V), Tp, Vp)          # (Tp, Vp)

    out = pl.pallas_call(
        _make_kernel(T),
        out_shape=jax.ShapeDtypeStruct((1, Vp), jnp.float32),
        # Small shapes: single grid point, all operands resident in VMEM.
        in_specs=[pl.BlockSpec(memory_space=pltpu.VMEM)] * 6,
        out_specs=pl.BlockSpec(memory_space=pltpu.VMEM),
    )(q2, k2, v2, prepared["wq_t"], prepared["wk_t"], prepared["wv_row"])

    return out[:, :V]                                  # (1, V)


def _reference_forward(queries, keys, values, params):
    q = queries @ params["w_q"].T                      # (1,1,H)
    k = keys @ params["w_k"].T                         # (T,1,H)
    feats = jnp.tanh(q + k)                            # (T,1,H)
    scores = feats @ params["w_v"].T                   # (T,1,1)
    attn = jax.nn.softmax(scores, axis=0)              # softmax over dim 0
    bmm = jnp.matmul(attn, values)                     # (T,1,V)
    return jnp.sum(bmm, axis=0)                        # (1,V)


if __name__ == "__main__":
    KEY_SIZE, QUERY_SIZE, NUM_HIDDENS, VALUE_DIM, SEQ_LEN = 16, 24, 32, 20, 10

    key = jax.random.PRNGKey(0)
    kq, kk, kv, k1, k2, k3 = jax.random.split(key, 6)

    s = 1.0 / (NUM_HIDDENS ** 0.5)
    params = {
        "w_q": jax.random.uniform(k1, (NUM_HIDDENS, QUERY_SIZE), jnp.float32, -s, s),
        "w_k": jax.random.uniform(k2, (NUM_HIDDENS, KEY_SIZE), jnp.float32, -s, s),
        "w_v": jax.random.uniform(k3, (1, NUM_HIDDENS), jnp.float32, -s, s),
    }
    queries = jax.random.normal(kq, (1, 1, QUERY_SIZE), jnp.float32)
    keys = jax.random.normal(kk, (SEQ_LEN, 1, KEY_SIZE), jnp.float32)
    values = jax.random.normal(kv, (SEQ_LEN, 1, VALUE_DIM), jnp.float32)

    prepared = prepare_params(params)                  # one-time transpose/pad
    out = additive_attention_forward(queries, keys, values, prepared)
    jax.block_until_ready(out)

    ref = _reference_forward(queries, keys, values, params)
    assert out.shape == ref.shape == (1, VALUE_DIM)
    assert jnp.allclose(out, ref, atol=1e-5, rtol=1e-5)

    print("KERNEL_OK")
</pallas_src>

<mosaic_0001>
module attributes {stable_mosaic.version = 11 : i64} {
  func.func @kernel(%arg0: memref<1x128xf32, #tpu.memory_space<vmem>>, %arg1: memref<16x128xf32, #tpu.memory_space<vmem>>, %arg2: memref<16x128xf32, #tpu.memory_space<vmem>>, %arg3: memref<128x128xf32, #tpu.memory_space<vmem>>, %arg4: memref<128x128xf32, #tpu.memory_space<vmem>>, %arg5: memref<1x128xf32, #tpu.memory_space<vmem>>, %arg6: memref<1x128xf32, #tpu.memory_space<vmem>>) attributes {dimension_semantics = [], scalar_prefetch = 0 : i64, scratch_operands = 0 : i64, tpu.core_type = #tpu.core_type<tc>} {
    %c0 = arith.constant 0 : index
    %c0_0 = arith.constant 0 : index
    %0 = vector.load %arg0[%c0, %c0_0] : memref<1x128xf32, #tpu.memory_space<vmem>>, vector<1x128xf32>
    %c0_1 = arith.constant 0 : index
    %c0_2 = arith.constant 0 : index
    %1 = vector.load %arg3[%c0_1, %c0_2] : memref<128x128xf32, #tpu.memory_space<vmem>>, vector<128x128xf32>
    %cst = arith.constant dense<0.000000e+00> : vector<1x128xf32>
    %2 = tpu.matmul %0, %1, %cst {dimension_numbers = #tpu.dot_dimension_numbers<[1], [0], [0], [1], [0, 0, 1, 1], [], []>} : vector<1x128xf32>, vector<128x128xf32>, vector<1x128xf32> -> vector<1x128xf32>
    %c0_3 = arith.constant 0 : index
    %c0_4 = arith.constant 0 : index
    %3 = vector.load %arg1[%c0_3, %c0_4] : memref<16x128xf32, #tpu.memory_space<vmem>>, vector<16x128xf32>
    %c0_5 = arith.constant 0 : index
    %c0_6 = arith.constant 0 : index
    %4 = vector.load %arg4[%c0_5, %c0_6] : memref<128x128xf32, #tpu.memory_space<vmem>>, vector<128x128xf32>
    %cst_7 = arith.constant dense<0.000000e+00> : vector<16x128xf32>
    %5 = tpu.matmul %3, %4, %cst_7 {dimension_numbers = #tpu.dot_dimension_numbers<[1], [0], [0], [1], [0, 0, 1, 1], [], []>} : vector<16x128xf32>, vector<128x128xf32>, vector<16x128xf32> -> vector<16x128xf32>
    %6 = vector.broadcast %2 : vector<1x128xf32> to vector<16x128xf32>
    %7 = arith.addf %5, %6 : vector<16x128xf32>
    %8 = math.tanh %7 : vector<16x128xf32>
    %c0_8 = arith.constant 0 : index
    %c0_9 = arith.constant 0 : index
    %9 = vector.load %arg5[%c0_8, %c0_9] : memref<1x128xf32, #tpu.memory_space<vmem>>, vector<1x128xf32>
    %10 = vector.broadcast %9 : vector<1x128xf32> to vector<16x128xf32>
    %11 = arith.mulf %8, %10 : vector<16x128xf32>
    %cst_10 = arith.constant dense<0.000000e+00> : vector<16xf32>
    %12 = vector.multi_reduction <add>, %11, %cst_10 [1] : vector<16x128xf32> to vector<16xf32>
    %13 = vector.shape_cast %12 : vector<16xf32> to vector<16x1xf32>
    %14 = tpu.iota {dimensions = array<i32: 0>} : vector<16x1xi32>
    %c10_i32 = arith.constant 10 : i32
    %15 = vector.broadcast %c10_i32 : i32 to vector<16x1xi32>
    %16 = arith.cmpi slt, %14, %15 : vector<16x1xi32>
    %cst_11 = arith.constant -1.000000e+30 : f32
    %17 = vector.broadcast %cst_11 : f32 to vector<16x1xf32>
    %18 = arith.select %16, %13, %17 : vector<16x1xi1>, vector<16x1xf32>
    %cst_12 = arith.constant dense<0xFF800000> : vector<1xf32>
    %19 = vector.multi_reduction <maximumf>, %18, %cst_12 [0] : vector<16x1xf32> to vector<1xf32>
    %20 = vector.shape_cast %19 : vector<1xf32> to vector<1x1xf32>
    %21 = vector.broadcast %20 : vector<1x1xf32> to vector<16x1xf32>
    %22 = arith.subf %18, %21 : vector<16x1xf32>
    %23 = math.exp %22 : vector<16x1xf32>
    %cst_13 = arith.constant dense<0.000000e+00> : vector<1xf32>
    %24 = vector.multi_reduction <add>, %23, %cst_13 [0] : vector<16x1xf32> to vector<1xf32>
    %25 = vector.shape_cast %24 : vector<1xf32> to vector<1x1xf32>
    %26 = vector.broadcast %25 : vector<1x1xf32> to vector<16x1xf32>
    %27 = arith.divf %23, %26 : vector<16x1xf32>
    %c0_14 = arith.constant 0 : index
    %c0_15 = arith.constant 0 : index
    %28 = vector.load %arg2[%c0_14, %c0_15] : memref<16x128xf32, #tpu.memory_space<vmem>>, vector<16x128xf32>
    %29 = vector.broadcast %27 : vector<16x1xf32> to vector<16x128xf32>
    %30 = arith.mulf %29, %28 : vector<16x128xf32>
    %cst_16 = arith.constant dense<0.000000e+00> : vector<128xf32>
    %31 = vector.multi_reduction <add>, %30, %cst_16 [0] : vector<16x128xf32> to vector<128xf32>
    %32 = vector.shape_cast %31 : vector<128xf32> to vector<1x128xf32>
    %c0_17 = arith.constant 0 : index
    %c0_18 = arith.constant 0 : index
    %33 = vector.load %arg6[%c0_17, %c0_18] : memref<1x128xf32, #tpu.memory_space<vmem>>, vector<1x128xf32>
    tpu.vector_store %arg6[%c0_17, %c0_18], %32 {strides = array<i32>} : memref<1x128xf32, #tpu.memory_space<vmem>>, vector<1x128xf32>,
    return
  }
}

</mosaic_0001>

<llo_original>
// kernel: tpu_custom_call.1
$region0: #{tpu_custom_call.1}
  #allocation0 [shape = 'u32[]', space=smem, size = 0x4, offset = 0x4, fixed_abs, tag = 'smem constant byte address 0x4 - core index']
  #allocation1 [shape = 'u32[72,128]{1,0:T(1,128)}', space=vmem, size = 0x9000, scoped, tag = 'internal scratch']
  %s0 = inlined_call_operand.hbm [shape: f32[1,128], index: 0, kind: input, shape index: {}]
  %s1 = inlined_call_operand.hbm [shape: f32[16,128], index: 1, kind: input, shape index: {}]
  %s2 = inlined_call_operand.hbm [shape: f32[16,128], index: 2, kind: input, shape index: {}]
  %s3 = inlined_call_operand.hbm [shape: f32[128,128], index: 3, kind: input, shape index: {}]
  %s4 = inlined_call_operand.hbm [shape: f32[128,128], index: 4, kind: input, shape index: {}]
  %s5 = inlined_call_operand.vmem [shape: f32[1,128], index: 5, kind: input, shape index: {}]
  %s6 = inlined_call_operand.hbm [shape: f32[1,128], index: 6, kind: output, shape index: {}]
  %s7 = sld [smem:[#allocation0]]
  $region54: #{tpu_custom_call.1} parent=0
    _
  %s9 = ssub.s32 1, %s7
  %s10 = scalar_select 0, %s9, %s7
  $region1: #{tpu_custom_call.1} parent=0
    #allocation2 [shape = 'u8[512]{0}', space=vmem, size = 0x400, scoped, tag = 'input window, operand 0, single buffered']
    #allocation3 [shape = 's32[1]{0}', space=sflag, size = 0x4, scoped, tag = 'scoped memory for tpu_custom_call.1']
    #allocation4 [shape = 's32[1]{0}', space=sflag, size = 0x4, scoped, tag = 'scoped memory for tpu_custom_call.1']
    #allocation5 [shape = 'u8[8192]{0}', space=vmem, size = 0x2000, scoped, tag = 'input window, operand 1, single buffered']
    #allocation6 [shape = 's32[1]{0}', space=sflag, size = 0x4, scoped, tag = 'scoped memory for tpu_custom_call.1']
    #allocation7 [shape = 'u8[8192]{0}', space=vmem, size = 0x2000, scoped, tag = 'input window, operand 2, single buffered']
    #allocation8 [shape = 'u8[65536]{0}', space=vmem, size = 0x10000, scoped, tag = 'input window, operand 3, single buffered']
    #allocation9 [shape = 's32[1]{0}', space=sflag, size = 0x4, scoped, tag = 'scoped memory for tpu_custom_call.1']
    #allocation10 [shape = 'u8[65536]{0}', space=vmem, size = 0x10000, scoped, tag = 'input window, operand 4, single buffered']
    #allocation11 [shape = 'u8[512]{0}', space=vmem, size = 0x400, scoped, tag = 'output window, operand 0, single buffered']
    %11 = vsyncpa [#allocation3], 0
    %12 = vsyncpa [#allocation6], 0
    %13 = vsyncpa [#allocation9], 0
    %14 = vsyncpa [#allocation4], 0
    // Predicated region
    $region2: #{tpu_custom_call.1} parent=1 // pred_check
      _
    $region3: #{tpu_custom_call.1} parent=1 // pred_check_branch
      %16 = sbr.rel (0) target = $region5
    $region4: #{tpu_custom_call.1} parent=1 // pred_region
      %18 = vsyncadd [#allocation3], 0
      %s20 = sshll.u32 %s0, 4
      %s21 = int_to_ptr.hbm [resolvable:$true] %s20
      %s22 = sshll.u32 [#allocation2], 4
      %s23 = int_to_ptr.vmem [resolvable:$true] %s22
      %25 = dma.hbm_to_vmem [thread:$0]  %s21, 16, %s23, [#allocation3]
    $region5: #{tpu_custom_call.1} parent=1 // pred_fallthru
      _
    // Predicated region
    $region6: #{tpu_custom_call.1} parent=1 // pred_check
      _
    $region7: #{tpu_custom_call.1} parent=1 // pred_check_branch
      %27 = sbr.rel (0) target = $region9
    $region8: #{tpu_custom_call.1} parent=1 // pred_region
      %29 = vsyncadd [#allocation6], 0
      %s30 = sshll.u32 %s1, 4
      %s31 = int_to_ptr.hbm [resolvable:$true] %s30
      %s32 = sshll.u32 [#allocation5], 4
      %s33 = int_to_ptr.vmem [resolvable:$true] %s32
      %38 = dma.hbm_to_vmem [thread:$0]  %s31, 256, %s33, [#allocation6], 128, 128, 8
    $region9: #{tpu_custom_call.1} parent=1 // pred_fallthru
      _
    // Predicated region
    $region10: #{tpu_custom_call.1} parent=1 // pred_check
      _
    $region11: #{tpu_custom_call.1} parent=1 // pred_check_branch
      %40 = sbr.rel (0) target = $region13
    $region12: #{tpu_custom_call.1} parent=1 // pred_region
      %42 = vsyncadd [#allocation6], 0
      %s43 = sshll.u32 %s2, 4
      %s44 = int_to_ptr.hbm [resolvable:$true] %s43
      %s45 = sshll.u32 [#allocation7], 4
      %s46 = int_to_ptr.vmem [resolvable:$true] %s45
      %51 = dma.hbm_to_vmem [thread:$0]  %s44, 256, %s46, [#allocation6], 128, 128, 8
    $region13: #{tpu_custom_call.1} parent=1 // pred_fallthru
      _
    // Predicated region
    $region14: #{tpu_custom_call.1} parent=1 // pred_check
      _
    $region15: #{tpu_custom_call.1} parent=1 // pred_check_branch
      %53 = sbr.rel (0) target = $region17
    $region16: #{tpu_custom_call.1} parent=1 // pred_region
      %55 = vsyncadd [#allocation9], 0
      %s56 = sshll.u32 %s3, 4
      %s57 = int_to_ptr.hbm [resolvable:$true] %s56
      %s58 = sshll.u32 [#allocation8], 4
      %s59 = int_to_ptr.vmem [resolvable:$true] %s58
      %64 = dma.hbm_to_vmem [thread:$0]  %s57, 2048, %s59, [#allocation9], 128, 128, 8
    $region17: #{tpu_custom_call.1} parent=1 // pred_fallthru
      _
    // Predicated region
    $region18: #{tpu_custom_call.1} parent=1 // pred_check
      _
    $region19: #{tpu_custom_call.1} parent=1 // pred_check_branch
      %66 = sbr.rel (0) target = $region21
    $region20: #{tpu_custom_call.1} parent=1 // pred_region
      %68 = vsyncadd [#allocation9], 0
      %s69 = sshll.u32 %s4, 4
      %s70 = int_to_ptr.hbm [resolvable:$true] %s69
      %s71 = sshll.u32 [#allocation10], 4
      %s72 = int_to_ptr.vmem [resolvable:$true] %s71
      %77 = dma.hbm_to_vmem [thread:$0]  %s70, 2048, %s72, [#allocation9], 128, 128, 8
    $region21: #{tpu_custom_call.1} parent=1 // pred_fallthru
      _
    // Predicated region
    $region22: #{tpu_custom_call.1} parent=1 // pred_check
      _
    $region23: #{tpu_custom_call.1} parent=1 // pred_check_branch
      %79 = sbr.rel (0) target = $region25
    $region24: #{tpu_custom_call.1} parent=1 // pred_region
      _
    $region25: #{tpu_custom_call.1} parent=1 // pred_fallthru
      _
    // Predicated region
    $region26: #{tpu_custom_call.1} parent=1 // pred_check
      _
    $region27: #{tpu_custom_call.1} parent=1 // pred_check_branch
      %81 = sbr.rel (0) target = $region29
    $region28: #{tpu_custom_call.1} parent=1 // pred_region
      %83 = dma.done [#allocation3], 16
    $region29: #{tpu_custom_call.1} parent=1 // pred_fallthru
      _
    // Predicated region
    $region30: #{tpu_custom_call.1} parent=1 // pred_check
      _
    $region31: #{tpu_custom_call.1} parent=1 // pred_check_branch
      %85 = sbr.rel (0) target = $region33
    $region32: #{tpu_custom_call.1} parent=1 // pred_region
      %87 = dma.done [#allocation6], 256
    $region33: #{tpu_custom_call.1} parent=1 // pred_fallthru
      _
    // Predicated region
    $region34: #{tpu_custom_call.1} parent=1 // pred_check
      _
    $region35: #{tpu_custom_call.1} parent=1 // pred_check_branch
      %89 = sbr.rel (0) target = $region37
    $region36: #{tpu_custom_call.1} parent=1 // pred_region
      %91 = dma.done [#allocation6], 256
    $region37: #{tpu_custom_call.1} parent=1 // pred_fallthru
      _
    // Predicated region
    $region38: #{tpu_custom_call.1} parent=1 // pred_check
      _
    $region39: #{tpu_custom_call.1} parent=1 // pred_check_branch
      %93 = sbr.rel (0) target = $region41
    $region40: #{tpu_custom_call.1} parent=1 // pred_region
      %95 = dma.done [#allocation9], 2048
    $region41: #{tpu_custom_call.1} parent=1 // pred_fallthru
      _
    // Predicated region
    $region42: #{tpu_custom_call.1} parent=1 // pred_check
      _
    $region43: #{tpu_custom_call.1} parent=1 // pred_check_branch
      %97 = sbr.rel (0) target = $region45
    $region44: #{tpu_custom_call.1} parent=1 // pred_region
      %99 = dma.done [#allocation9], 2048
    $region45: #{tpu_custom_call.1} parent=1 // pred_fallthru
      _
    %v100 = vld [vmem:[#allocation2] sm:$0x1]
    %v101 = vld [vmem:[#allocation8] sm:$0xff]
    %v102 = vld [vmem:[#allocation8 + $0x8] sm:$0xff]
    %v103 = vld [vmem:[#allocation8 + $0x10] sm:$0xff]
    %v104 = vld [vmem:[#allocation8 + $0x18] sm:$0xff]
    %v105 = vld [vmem:[#allocation8 + $0x20] sm:$0xff]
    %v106 = vld [vmem:[#allocation8 + $0x28] sm:$0xff]
    %v107 = vld [vmem:[#allocation8 + $0x30] sm:$0xff]
    %v108 = vld [vmem:[#allocation8 + $0x38] sm:$0xff]
    %v109 = vld [vmem:[#allocation8 + $0x40] sm:$0xff]
    %v110 = vld [vmem:[#allocation8 + $0x48] sm:$0xff]
    %v111 = vld [vmem:[#allocation8 + $0x50] sm:$0xff]
    %v112 = vld [vmem:[#allocation8 + $0x58] sm:$0xff]
    %v113 = vld [vmem:[#allocation8 + $0x60] sm:$0xff]
    %v114 = vld [vmem:[#allocation8 + $0x68] sm:$0xff]
    %v115 = vld [vmem:[#allocation8 + $0x70] sm:$0xff]
    %v116 = vld [vmem:[#allocation8 + $0x78] sm:$0xff]
    %117 = vmatpush.msra.mxu0 %v116
    %118 = vmatpush.msra.mxu0 %v115
    %119 = vmatpush.msra.mxu0 %v114
    %120 = vmatpush.msra.mxu0 %v113
    %121 = vmatpush.msra.mxu0 %v112
    %122 = vmatpush.msra.mxu0 %v111
    %123 = vmatpush.msra.mxu0 %v110
    %124 = vmatpush.msra.mxu0 %v109
    %125 = vmatpush.msra.mxu0 %v108
    %126 = vmatpush.msra.mxu0 %v107
    %127 = vmatpush.msra.mxu0 %v106
    %128 = vmatpush.msra.mxu0 %v105
    %129 = vmatpush.msra.mxu0 %v104
    %130 = vmatpush.msra.mxu0 %v103
    %131 = vmatpush.msra.mxu0 %v102
    %132 = vmatpush.msra.mxu0 %v101
    %133 = vmatmul.f32.gmra.mxu0 %v100
    %v134 = vpop.f32.mrf.mxu0
    %v135 = vadd.f32 0.0, %v134
    %136 = vdwg.mxu0
    %v137 = vld [vmem:[#allocation5] sm:$0xff]
    %v138 = vld [vmem:[#allocation5 + $0x8] sm:$0xff]
    %v139 = vld [vmem:[#allocation10] sm:$0xff]
    %v140 = vld [vmem:[#allocation10 + $0x8] sm:$0xff]
    %v141 = vld [vmem:[#allocation10 + $0x10] sm:$0xff]
    %v142 = vld [vmem:[#allocation10 + $0x18] sm:$0xff]
    %v143 = vld [vmem:[#allocation10 + $0x20] sm:$0xff]
    %v144 = vld [vmem:[#allocation10 + $0x28] sm:$0xff]
    %v145 = vld [vmem:[#allocation10 + $0x30] sm:$0xff]
    %v146 = vld [vmem:[#allocation10 + $0x38] sm:$0xff]
    %v147 = vld [vmem:[#allocation10 + $0x40] sm:$0xff]
    %v148 = vld [vmem:[#allocation10 + $0x48] sm:$0xff]
    %v149 = vld [vmem:[#allocation10 + $0x50] sm:$0xff]
    %v150 = vld [vmem:[#allocation10 + $0x58] sm:$0xff]
    %v151 = vld [vmem:[#allocation10 + $0x60] sm:$0xff]
    %v152 = vld [vmem:[#allocation10 + $0x68] sm:$0xff]
    %v153 = vld [vmem:[#allocation10 + $0x70] sm:$0xff]
    %v154 = vld [vmem:[#allocation10 + $0x78] sm:$0xff]
    %v155 = vperm.slane %v135, 0
    %156 = vmatpush.msra.mxu0 %v154
    %157 = vmatpush.msra.mxu0 %v153
    %158 = vmatpush.msra.mxu0 %v152
    %159 = vmatpush.msra.mxu0 %v151
    %160 = vmatpush.msra.mxu0 %v150
    %161 = vmatpush.msra.mxu0 %v149
    %162 = vmatpush.msra.mxu0 %v148
    %163 = vmatpush.msra.mxu0 %v147
    %164 = vmatpush.msra.mxu0 %v146
    %165 = vmatpush.msra.mxu0 %v145
    %166 = vmatpush.msra.mxu0 %v144
    %167 = vmatpush.msra.mxu0 %v143
    %168 = vmatpush.msra.mxu0 %v142
    %169 = vmatpush.msra.mxu0 %v141
    %170 = vmatpush.msra.mxu0 %v140
    %171 = vmatpush.msra.mxu0 %v139
    %172 = vmatmul.f32.gmra.mxu0 %v137
    %v173 = vpop.f32.mrf.mxu0
    %v174 = vadd.f32 %v155, %v173
    %175 = vmatmul.f32.gmra.mxu0 %v138
    %v176 = vpop.f32.mrf.mxu0
    %v177 = vadd.f32 %v155, %v176
    %178 = vdwg.mxu0
    %v179 = vtanh.pop %v174
    %v180 = vtanh.pop %v177
    %v181 = vld [vmem:[%s5] sm:$0x1]
    %v183 = vperm.slane %v181, 0
    %v185 = vmul.f32 %v179, %v183
    %v186 = vmul.f32 %v180, %v183
    %187 = vadd.xlane.f32.xlu0 %v185
    %v188 = vpop.xlane.xlu0 %187
    %189 = vadd.xlane.f32.xlu0 %v186
    %v190 = vpop.xlane.xlu0 %189
    %v191 = vlaneseq
    %v192 = vshrl.u32 %v191, 7
    %v193 = vadd.s32 %v192, 8
    %vm194 = vcmp.lt.s32.totalorder %v192, 10
    %vm195 = vcmp.lt.s32.totalorder %v193, 10
    %v196 = vsel %vm194, %v188, -1e+30
    %v197 = vsel %vm195, %v190, -1e+30
    %v198 = vmax.f32 %v196, %v197
    %v199 = vrot.slane %v198, 4
    %v200 = vmax.f32 %v198, %v199
    %v201 = vrot.slane %v200, 2
    %v202 = vmax.f32 %v200, %v201
    %v203 = vrot.slane %v202, 1
    %v204 = vmax.f32 %v202, %v203
    %v205 = vsub.f32 %v196, %v204
    %v206 = vsub.f32 %v197, %v204
    %v207 = vmul.f32 %v205, 1.442695
    %v208 = vpow.pop %v207
    %v209 = vmul.f32 %v206, 1.442695
    %v210 = vpow.pop %v209
    %v211 = vadd.f32 %v208, %v210
    %v212 = vrot.slane %v211, 4
    %v213 = vadd.f32 %v211, %v212
    %v214 = vrot.slane %v213, 2
    %v215 = vadd.f32 %v213, %v214
    %v216 = vrot.slane %v215, 1
    %v217 = vadd.f32 %v215, %v216
    %v218 = vrcp.pop %v217
    %v219 = vmul.f32 %v217, %v218
    %v220 = vsub.f32 1.0, %v219
    %v221 = vmul.f32 %v218, %v220
    %v222 = vadd.f32 %v218, %v221
    %vm223 = vweird.f32 %v217
    %vm224 = vweird.f32 %v218
    %vm225 = vmor %vm223, %vm224
    %v226 = vsel %vm225, %v218, %v222
    %v227 = vand.u32 2147483647, %v217
    %vm228 = vcmp.eq.f32.partialorder %v227, 8.507059e+37
    %v229 = vand.u32 %v217, 2147483648
    %v230 = vor.u32 1.1754944e-38, %v229
    %v231 = vsel %vm228, %v230, %v226
    %v232 = vmul.f32 %v208, %v231
    %v233 = vmul.f32 %v210, %v231
    %v234 = vld [vmem:[#allocation7] sm:$0xff]
    %v235 = vld [vmem:[#allocation7 + $0x8] sm:$0xff]
    %v236 = vmul.f32 %v232, %v234
    %v237 = vmul.f32 %v233, %v235
    %v238 = vadd.f32 %v236, %v237
    %v239 = vrot.slane %v238, 4
    %v240 = vadd.f32 %v238, %v239
    %v241 = vrot.slane %v240, 2
    %v242 = vadd.f32 %v240, %v241
    %v243 = vrot.slane %v242, 1
    %v244 = vadd.f32 %v242, %v243
    %245 = vst [vmem:[#allocation11] sm:$0x1] %v244
    // Predicated region
    $region46: #{tpu_custom_call.1} parent=1 // pred_check
      _
    $region47: #{tpu_custom_call.1} parent=1 // pred_check_branch
      %247 = sbr.rel (0) target = $region49
    $region48: #{tpu_custom_call.1} parent=1 // pred_region
      %249 = vsyncadd [#allocation4], 0
      %s251 = sshll.u32 [#allocation11], 4
      %s252 = int_to_ptr.vmem [resolvable:$true] %s251
      %s253 = sshll.u32 %s6, 4
      %s254 = int_to_ptr.hbm [resolvable:$true] %s253
      %256 = dma.vmem_to_hbm [thread:$0]  %s252, 16, %s254, [#allocation4]
    $region49: #{tpu_custom_call.1} parent=1 // pred_fallthru
      _
    // Predicated region
    $region50: #{tpu_custom_call.1} parent=1 // pred_check
      _
    $region51: #{tpu_custom_call.1} parent=1 // pred_check_branch
      %258 = sbr.rel (0) target = $region53
    $region52: #{tpu_custom_call.1} parent=1 // pred_region
      %260 = dma.done [#allocation4], 16
    $region53: #{tpu_custom_call.1} parent=1 // pred_fallthru
      _
    %261 = vsyncpa [#allocation3], 1
    %262 = vsyncpa [#allocation6], 1
    %263 = vsyncpa [#allocation9], 1
    %264 = vsyncpa [#allocation4], 1

</llo_original>
